<compile_context>
chip_gen: v7x
topology: tpu7x:2x2x1
jax: 0.10.0
libtpu: 0.0.40
codegen_flags: <defaults>
</compile_context>

<pallas_src>
import jax
import jax.numpy as jnp
from jax.experimental import pallas as pl
from jax.experimental.pallas import tpu as pltpu

HIDDEN = 128
N_OUT_WIDE = 128              # lane-dense padded output width (small/medium B)
N_OUT_NARROW_ALIGN = 8        # sublane-aligned narrow output width (large B)
NARROW_OUTPUT_MIN_BATCH = 1024  # switch to narrow output above this batch size


def _round_up(v, m):
    return ((v + m - 1) // m) * m


def policy_net_kernel(x_ref, w1_ref, b1_ref, w2_ref, b2_ref, w3_ref, b3_ref, o_ref):
    x = x_ref[...]                     # (TB, n_obs)   n_obs is tiny (4)
    w1 = w1_ref[...]                   # (n_obs, 128)
    n_obs = x.shape[1]

    # ---- Layer 1 + ReLU on the VPU ------------------------------------
    # K=4 contraction: an MXU dot would be ~all latency/drain. Do it as a few
    # broadcast multiply-adds instead (bias broadcast hoisted into the first MAC).
    h1 = b1_ref[...] + x[:, 0:1] * w1[0:1, :]          # (TB, 128)
    for k in range(1, n_obs):                          # static unroll, n_obs small
        h1 = h1 + x[:, k:k + 1] * w1[k:k + 1, :]
    h1 = jnp.maximum(h1, 0.0)

    # ---- Layer 2 + ReLU on the MXU (128x128, f32 accumulation) ---------
    h2 = jnp.dot(h1, w2_ref[...], preferred_element_type=jnp.float32) + b2_ref[...]
    h2 = jnp.maximum(h2, 0.0)

    # ---- Layer 3 on the MXU (output padded to 128 or 8 lanes) ----------
    y = jnp.dot(h2, w3_ref[...], preferred_element_type=jnp.float32) + b3_ref[...]
    o_ref[...] = y.astype(o_ref.dtype)                 # (TB, n_out) store


def prepare_params(params):
    """One-time param prep: cache zero-padded W3/b3 (lane-dense 128 and narrow 8).

    Keeps the padding ops off the per-call latency path.
    """
    w3, b3 = params["W3"], params["b3"]
    h, n_actions = w3.shape
    narrow = _round_up(n_actions, N_OUT_NARROW_ALIGN)

    prepped = dict(params)
    prepped["W3_wide"] = jnp.zeros((h, N_OUT_WIDE), w3.dtype).at[:, :n_actions].set(w3)
    prepped["b3_wide"] = jnp.zeros((1, N_OUT_WIDE), b3.dtype).at[:, :n_actions].set(b3)
    prepped["W3_narrow"] = jnp.zeros((h, narrow), w3.dtype).at[:, :n_actions].set(w3)
    prepped["b3_narrow"] = jnp.zeros((1, narrow), b3.dtype).at[:, :n_actions].set(b3)
    return prepped


def _forward_impl(x, prepped, *, max_batch_tile=1024):
    """x: (B, n_obs) float32. prepped: output of prepare_params()."""
    w1, b1 = prepped["W1"], prepped["b1"]
    w2, b2 = prepped["W2"], prepped["b2"]
    n_actions = prepped["W3"].shape[1]

    B, n_obs = x.shape

    # --- Output width selection ------------------------------------------
    # Small/medium B: lane-dense 128-wide output (unmasked vst, negligible
    # extra HBM traffic).  Large B: narrow 8-wide output -> 16x less output
    # writeback where it would dominate the HBM stream.
    if B >= NARROW_OUTPUT_MIN_BATCH:
        w3p, b3p = prepped["W3_narrow"], prepped["b3_narrow"]
    else:
        w3p, b3p = prepped["W3_wide"], prepped["b3_wide"]
    n_out = w3p.shape[1]

    # --- Batch tiling ------------------------------------------------------
    # Minimize padding waste; guarantee >= 2 balanced tiles when B > 16 so the
    # "parallel" batch axis shards across both v7x TensorCores; cap the tile
    # (rounded to 8 sublanes) to amortize per-grid-step overhead at large B.
    max_batch_tile = max(8, _round_up(max_batch_tile, 8))
    num_tiles = pl.cdiv(B, max_batch_tile)
    if B > 16:
        num_tiles = max(num_tiles, 2)
    TB = _round_up(pl.cdiv(B, num_tiles), 8)
    B_pad = _round_up(B, TB)
    if B_pad != B:
        x = jnp.pad(x, ((0, B_pad - B), (0, 0)))
    grid = (B_pad // TB,)

    const2d = lambda a: pl.BlockSpec(a.shape, lambda i: (0, 0))  # VMEM-resident

    out = pl.pallas_call(
        policy_net_kernel,
        out_shape=jax.ShapeDtypeStruct((B_pad, n_out), jnp.float32),
        grid=grid,
        in_specs=[
            pl.BlockSpec((TB, n_obs), lambda i: (i, 0)),   # x tile (pipelined)
            const2d(w1), const2d(b1),
            const2d(w2), const2d(b2),
            const2d(w3p), const2d(b3p),
        ],
        out_specs=pl.BlockSpec((TB, n_out), lambda i: (i, 0)),
        compiler_params=pltpu.CompilerParams(
            dimension_semantics=("parallel",),        # megacore-shard batch axis
            vmem_limit_bytes=32 * 1024 * 1024,
        ),
    )(x, w1, b1, w2, b2, w3p, b3p)

    return out[:B, :n_actions]


policy_net_forward = jax.jit(_forward_impl, static_argnames=("max_batch_tile",))


def init_params(key, n_observations, n_actions):
    """Deterministic init mimicking PyTorch nn.Linear default (U[-1/sqrt(fan_in), +])."""
    ks = jax.random.split(key, 6)

    def linear(kw, kb, fan_in, fan_out):
        bound = 1.0 / jnp.sqrt(jnp.float32(fan_in))
        W = jax.random.uniform(kw, (fan_in, fan_out), jnp.float32, -bound, bound)
        b = jax.random.uniform(kb, (1, fan_out), jnp.float32, -bound, bound)
        return W, b

    W1, b1 = linear(ks[0], ks[1], n_observations, HIDDEN)
    W2, b2 = linear(ks[2], ks[3], HIDDEN, HIDDEN)
    W3, b3 = linear(ks[4], ks[5], HIDDEN, n_actions)
    return {"W1": W1, "b1": b1, "W2": W2, "b2": b2, "W3": W3, "b3": b3}


def reference_forward(x, p):
    h1 = jnp.maximum(x @ p["W1"] + p["b1"], 0.0)
    h2 = jnp.maximum(h1 @ p["W2"] + p["b2"], 0.0)
    return h2 @ p["W3"] + p["b3"]


if __name__ == "__main__":
    # CartPole-v1: n_observations = 4, n_actions = 2
    n_observations, n_actions = 4, 2

    key = jax.random.PRNGKey(0)
    kp, k1, k2, k3 = jax.random.split(key, 4)
    params = init_params(kp, n_observations, n_actions)
    prepped = prepare_params(params)   # one-time: hoists W3/b3 padding off hot path

    def check(batch, kx):
        x = jax.random.normal(kx, (batch, n_observations), jnp.float32)
        out = jax.block_until_ready(policy_net_forward(x, prepped))
        ref = reference_forward(x, params)
        assert out.shape == (batch, n_actions), (out.shape, batch)
        assert jnp.allclose(out, ref, atol=1e-4, rtol=1e-4), f"mismatch (B={batch})"

    # Per-env-step inference: single tile, lane-dense output.
    check(8, k1)
    # Mid-size vectorized-RL batch: TB=152 -> B_pad=304, grid=(2,) (both v7x TCs),
    # only 4 padded rows (previously 212).
    check(300, k2)
    # Large batch: TB=1024, grid=(4,), narrow (TB, 8) output path exercised.
    check(4096, k3)

    print("KERNEL_OK")
</pallas_src>

<mosaic_0001>
module attributes {stable_mosaic.version = 11 : i64} {
  func.func @policy_net_kernel(%arg0: i32, %arg1: memref<8x4xf32, #tpu.memory_space<vmem>>, %arg2: memref<4x128xf32, #tpu.memory_space<vmem>>, %arg3: memref<1x128xf32, #tpu.memory_space<vmem>>, %arg4: memref<128x128xf32, #tpu.memory_space<vmem>>, %arg5: memref<1x128xf32, #tpu.memory_space<vmem>>, %arg6: memref<128x128xf32, #tpu.memory_space<vmem>>, %arg7: memref<1x128xf32, #tpu.memory_space<vmem>>, %arg8: memref<8x128xf32, #tpu.memory_space<vmem>>) attributes {dimension_semantics = [#tpu.dimension_semantics<parallel>], iteration_bounds = array<i64: 1>, scalar_prefetch = 0 : i64, scratch_operands = 0 : i64, tpu.core_type = #tpu.core_type<tc>, window_params = [{transform_indices = @transform_0, window_bounds = array<i64: 8, 4>}, {pipeline_mode = #tpu.pipeline_mode<synchronous>, transform_indices = @transform_1, window_bounds = array<i64: 4, 128>}, {pipeline_mode = #tpu.pipeline_mode<synchronous>, transform_indices = @transform_2, window_bounds = array<i64: 1, 128>}, {pipeline_mode = #tpu.pipeline_mode<synchronous>, transform_indices = @transform_3, window_bounds = array<i64: 128, 128>}, {pipeline_mode = #tpu.pipeline_mode<synchronous>, transform_indices = @transform_4, window_bounds = array<i64: 1, 128>}, {pipeline_mode = #tpu.pipeline_mode<synchronous>, transform_indices = @transform_5, window_bounds = array<i64: 128, 128>}, {pipeline_mode = #tpu.pipeline_mode<synchronous>, transform_indices = @transform_6, window_bounds = array<i64: 1, 128>}, {transform_indices = @transform_7, window_bounds = array<i64: 8, 128>}]} {
    %c0 = arith.constant 0 : index
    %c0_0 = arith.constant 0 : index
    %0 = vector.load %arg1[%c0, %c0_0] : memref<8x4xf32, #tpu.memory_space<vmem>>, vector<8x4xf32>
    %c0_1 = arith.constant 0 : index
    %c0_2 = arith.constant 0 : index
    %1 = vector.load %arg2[%c0_1, %c0_2] : memref<4x128xf32, #tpu.memory_space<vmem>>, vector<4x128xf32>
    %c0_3 = arith.constant 0 : index
    %c0_4 = arith.constant 0 : index
    %2 = vector.load %arg3[%c0_3, %c0_4] : memref<1x128xf32, #tpu.memory_space<vmem>>, vector<1x128xf32>
    %3 = vector.extract_strided_slice %0 {offsets = [0, 0], sizes = [8, 1], strides = [1, 1]} : vector<8x4xf32> to vector<8x1xf32>
    %4 = vector.extract_strided_slice %1 {offsets = [0, 0], sizes = [1, 128], strides = [1, 1]} : vector<4x128xf32> to vector<1x128xf32>
    %5 = vector.broadcast %3 : vector<8x1xf32> to vector<8x128xf32>
    %6 = vector.broadcast %4 : vector<1x128xf32> to vector<8x128xf32>
    %7 = arith.mulf %5, %6 : vector<8x128xf32>
    %8 = vector.broadcast %2 : vector<1x128xf32> to vector<8x128xf32>
    %9 = arith.addf %8, %7 : vector<8x128xf32>
    %10 = vector.extract_strided_slice %0 {offsets = [0, 1], sizes = [8, 1], strides = [1, 1]} : vector<8x4xf32> to vector<8x1xf32>
    %11 = vector.extract_strided_slice %1 {offsets = [1, 0], sizes = [1, 128], strides = [1, 1]} : vector<4x128xf32> to vector<1x128xf32>
    %12 = vector.broadcast %10 : vector<8x1xf32> to vector<8x128xf32>
    %13 = vector.broadcast %11 : vector<1x128xf32> to vector<8x128xf32>
    %14 = arith.mulf %12, %13 : vector<8x128xf32>
    %15 = arith.addf %9, %14 : vector<8x128xf32>
    %16 = vector.extract_strided_slice %0 {offsets = [0, 2], sizes = [8, 1], strides = [1, 1]} : vector<8x4xf32> to vector<8x1xf32>
    %17 = vector.extract_strided_slice %1 {offsets = [2, 0], sizes = [1, 128], strides = [1, 1]} : vector<4x128xf32> to vector<1x128xf32>
    %18 = vector.broadcast %16 : vector<8x1xf32> to vector<8x128xf32>
    %19 = vector.broadcast %17 : vector<1x128xf32> to vector<8x128xf32>
    %20 = arith.mulf %18, %19 : vector<8x128xf32>
    %21 = arith.addf %15, %20 : vector<8x128xf32>
    %22 = vector.extract_strided_slice %0 {offsets = [0, 3], sizes = [8, 1], strides = [1, 1]} : vector<8x4xf32> to vector<8x1xf32>
    %23 = vector.extract_strided_slice %1 {offsets = [3, 0], sizes = [1, 128], strides = [1, 1]} : vector<4x128xf32> to vector<1x128xf32>
    %24 = vector.broadcast %22 : vector<8x1xf32> to vector<8x128xf32>
    %25 = vector.broadcast %23 : vector<1x128xf32> to vector<8x128xf32>
    %26 = arith.mulf %24, %25 : vector<8x128xf32>
    %27 = arith.addf %21, %26 : vector<8x128xf32>
    %cst = arith.constant 0.000000e+00 : f32
    %28 = vector.broadcast %cst : f32 to vector<8x128xf32>
    %29 = arith.maximumf %27, %28 : vector<8x128xf32>
    %c0_5 = arith.constant 0 : index
    %c0_6 = arith.constant 0 : index
    %30 = vector.load %arg4[%c0_5, %c0_6] : memref<128x128xf32, #tpu.memory_space<vmem>>, vector<128x128xf32>
    %cst_7 = arith.constant dense<0.000000e+00> : vector<8x128xf32>
    %31 = tpu.matmul %29, %30, %cst_7 {dimension_numbers = #tpu.dot_dimension_numbers<[1], [0], [0], [1], [0, 0, 1, 1], [], []>} : vector<8x128xf32>, vector<128x128xf32>, vector<8x128xf32> -> vector<8x128xf32>
    %c0_8 = arith.constant 0 : index
    %c0_9 = arith.constant 0 : index
    %32 = vector.load %arg5[%c0_8, %c0_9] : memref<1x128xf32, #tpu.memory_space<vmem>>, vector<1x128xf32>
    %33 = vector.broadcast %32 : vector<1x128xf32> to vector<8x128xf32>
    %34 = arith.addf %31, %33 : vector<8x128xf32>
    %cst_10 = arith.constant 0.000000e+00 : f32
    %35 = vector.broadcast %cst_10 : f32 to vector<8x128xf32>
    %36 = arith.maximumf %34, %35 : vector<8x128xf32>
    %c0_11 = arith.constant 0 : index
    %c0_12 = arith.constant 0 : index
    %37 = vector.load %arg6[%c0_11, %c0_12] : memref<128x128xf32, #tpu.memory_space<vmem>>, vector<128x128xf32>
    %cst_13 = arith.constant dense<0.000000e+00> : vector<8x128xf32>
    %38 = tpu.matmul %36, %37, %cst_13 {dimension_numbers = #tpu.dot_dimension_numbers<[1], [0], [0], [1], [0, 0, 1, 1], [], []>} : vector<8x128xf32>, vector<128x128xf32>, vector<8x128xf32> -> vector<8x128xf32>
    %c0_14 = arith.constant 0 : index
    %c0_15 = arith.constant 0 : index
    %39 = vector.load %arg7[%c0_14, %c0_15] : memref<1x128xf32, #tpu.memory_space<vmem>>, vector<1x128xf32>
    %40 = vector.broadcast %39 : vector<1x128xf32> to vector<8x128xf32>
    %41 = arith.addf %38, %40 : vector<8x128xf32>
    %c0_16 = arith.constant 0 : index
    %c0_17 = arith.constant 0 : index
    %42 = vector.load %arg8[%c0_16, %c0_17] : memref<8x128xf32, #tpu.memory_space<vmem>>, vector<8x128xf32>
    tpu.vector_store %arg8[%c0_16, %c0_17], %41 {strides = array<i32>} : memref<8x128xf32, #tpu.memory_space<vmem>>, vector<8x128xf32>,
    return
  }
  func.func @transform_0(%arg0: i32) -> (i32, i32) {
    %c0_i32 = arith.constant 0 : i32
    %c0_i32_0 = arith.constant 0 : i32
    return %arg0, %c0_i32 : i32, i32
  }
  func.func @transform_1(%arg0: i32) -> (i32, i32) {
    %c0_i32 = arith.constant 0 : i32
    %c0_i32_0 = arith.constant 0 : i32
    %c0_i32_1 = arith.constant 0 : i32
    return %c0_i32, %c0_i32_0 : i32, i32
  }
  func.func @transform_2(%arg0: i32) -> (i32, i32) {
    %c0_i32 = arith.constant 0 : i32
    %c0_i32_0 = arith.constant 0 : i32
    %c0_i32_1 = arith.constant 0 : i32
    return %c0_i32, %c0_i32_0 : i32, i32
  }
  func.func @transform_3(%arg0: i32) -> (i32, i32) {
    %c0_i32 = arith.constant 0 : i32
    %c0_i32_0 = arith.constant 0 : i32
    %c0_i32_1 = arith.constant 0 : i32
    return %c0_i32, %c0_i32_0 : i32, i32
  }
  func.func @transform_4(%arg0: i32) -> (i32, i32) {
    %c0_i32 = arith.constant 0 : i32
    %c0_i32_0 = arith.constant 0 : i32
    %c0_i32_1 = arith.constant 0 : i32
    return %c0_i32, %c0_i32_0 : i32, i32
  }
  func.func @transform_5(%arg0: i32) -> (i32, i32) {
    %c0_i32 = arith.constant 0 : i32
    %c0_i32_0 = arith.constant 0 : i32
    %c0_i32_1 = arith.constant 0 : i32
    return %c0_i32, %c0_i32_0 : i32, i32
  }
  func.func @transform_6(%arg0: i32) -> (i32, i32) {
    %c0_i32 = arith.constant 0 : i32
    %c0_i32_0 = arith.constant 0 : i32
    %c0_i32_1 = arith.constant 0 : i32
    return %c0_i32, %c0_i32_0 : i32, i32
  }
  func.func @transform_7(%arg0: i32) -> (i32, i32) {
    %c0_i32 = arith.constant 0 : i32
    %c0_i32_0 = arith.constant 0 : i32
    return %arg0, %c0_i32 : i32, i32
  }
}

</mosaic_0001>

<llo_original>
// kernel: _forward_impl.1
$region0: #{_forward_impl.1}
  #allocation0 [shape = 'u32[]', space=smem, size = 0x4, offset = 0x4, fixed_abs, tag = 'smem constant byte address 0x4 - core index']
  #allocation1 [shape = 'u32[144,128]{1,0:T(1,128)}', space=vmem, size = 0x12000, scoped, tag = 'internal scratch']
  %s0 = inlined_call_operand.vmem [shape: f32[8,4], index: 0, kind: input, shape index: {}]
  %s1 = inlined_call_operand.vmem [shape: f32[4,128], index: 1, kind: input, shape index: {}]
  %s2 = inlined_call_operand.vmem [shape: f32[1,128], index: 2, kind: input, shape index: {}]
  %s3 = inlined_call_operand.hbm [shape: f32[128,128], index: 3, kind: input, shape index: {}]
  %s4 = inlined_call_operand.vmem [shape: f32[1,128], index: 4, kind: input, shape index: {}]
  %s5 = inlined_call_operand.hbm [shape: f32[128,128], index: 5, kind: input, shape index: {}]
  %s6 = inlined_call_operand.vmem [shape: f32[1,128], index: 6, kind: input, shape index: {}]
  %s7 = inlined_call_operand.vmem [shape: f32[8,128], index: 7, kind: output, shape index: {}]
  %s8 = sld [smem:[#allocation0]]
  $region46: #{_forward_impl.1} parent=0
    _
  %s10 = ssub.s32 1, %s8
  %s11 = scalar_select 0, %s10, %s8
  $region1: #{_forward_impl.1} parent=0
    #allocation2 [shape = 'u8[65536]{0}', space=vmem, size = 0x10000, scoped, tag = 'input window, operand 3, single buffered']
    #allocation3 [shape = 's32[1]{0}', space=sflag, size = 0x4, scoped, tag = 'scoped memory for _forward_impl.1']
    #allocation4 [shape = 'u8[65536]{0}', space=vmem, size = 0x10000, scoped, tag = 'input window, operand 5, single buffered']
    #allocation5 [shape = 's32[1]{0}', space=sflag, size = 0x4, scoped, tag = 'scoped memory for _forward_impl.1']
    %12 = vsyncpa [#allocation3], 0
    %13 = vsyncpa [#allocation5], 0
    // Predicated region
    $region2: #{_forward_impl.1} parent=1 // pred_check
      _
    $region3: #{_forward_impl.1} parent=1 // pred_check_branch
      %15 = sbr.rel (0) target = $region5
    $region4: #{_forward_impl.1} parent=1 // pred_region
      _
    $region5: #{_forward_impl.1} parent=1 // pred_fallthru
      _
    // Predicated region
    $region6: #{_forward_impl.1} parent=1 // pred_check
      _
    $region7: #{_forward_impl.1} parent=1 // pred_check_branch
      %17 = sbr.rel (0) target = $region9
    $region8: #{_forward_impl.1} parent=1 // pred_region
      _
    $region9: #{_forward_impl.1} parent=1 // pred_fallthru
      _
    // Predicated region
    $region10: #{_forward_impl.1} parent=1 // pred_check
      _
    $region11: #{_forward_impl.1} parent=1 // pred_check_branch
      %19 = sbr.rel (0) target = $region13
    $region12: #{_forward_impl.1} parent=1 // pred_region
      _
    $region13: #{_forward_impl.1} parent=1 // pred_fallthru
      _
    // Predicated region
    $region14: #{_forward_impl.1} parent=1 // pred_check
      _
    $region15: #{_forward_impl.1} parent=1 // pred_check_branch
      %21 = sbr.rel (0) target = $region17
    $region16: #{_forward_impl.1} parent=1 // pred_region
      %s23 = ssub.s32 2048, 2048
      %24 = vsyncadd [#allocation3], %s23
      %s25 = sshll.u32 [#allocation2], 4
      %s26 = int_to_ptr.vmem [resolvable:$true] %s25
      %31 = dma.hbm_to_vmem [thread:$0]  %s3, 2048, %s26, [#allocation3], 128, 128, 8
    $region17: #{_forward_impl.1} parent=1 // pred_fallthru
      _
    // Predicated region
    $region18: #{_forward_impl.1} parent=1 // pred_check
      _
    $region19: #{_forward_impl.1} parent=1 // pred_check_branch
      %33 = sbr.rel (0) target = $region21
    $region20: #{_forward_impl.1} parent=1 // pred_region
      _
    $region21: #{_forward_impl.1} parent=1 // pred_fallthru
      _
    // Predicated region
    $region22: #{_forward_impl.1} parent=1 // pred_check
      _
    $region23: #{_forward_impl.1} parent=1 // pred_check_branch
      %35 = sbr.rel (0) target = $region25
    $region24: #{_forward_impl.1} parent=1 // pred_region
      %s37 = ssub.s32 2048, 2048
      %38 = vsyncadd [#allocation5], %s37
      %s39 = sshll.u32 [#allocation4], 4
      %s40 = int_to_ptr.vmem [resolvable:$true] %s39
      %45 = dma.hbm_to_vmem [thread:$0]  %s5, 2048, %s40, [#allocation5], 128, 128, 8
    $region25: #{_forward_impl.1} parent=1 // pred_fallthru
      _
    // Predicated region
    $region26: #{_forward_impl.1} parent=1 // pred_check
      _
    $region27: #{_forward_impl.1} parent=1 // pred_check_branch
      %47 = sbr.rel (0) target = $region29
    $region28: #{_forward_impl.1} parent=1 // pred_region
      _
    $region29: #{_forward_impl.1} parent=1 // pred_fallthru
      _
    // Predicated region
    $region30: #{_forward_impl.1} parent=1 // pred_check
      _
    $region31: #{_forward_impl.1} parent=1 // pred_check_branch
      %49 = sbr.rel (0) target = $region33
    $region32: #{_forward_impl.1} parent=1 // pred_region
      %50 = dma.done [#allocation3], 2048
    $region33: #{_forward_impl.1} parent=1 // pred_fallthru
      _
    // Predicated region
    $region34: #{_forward_impl.1} parent=1 // pred_check
      _
    $region35: #{_forward_impl.1} parent=1 // pred_check_branch
      %52 = sbr.rel (0) target = $region37
    $region36: #{_forward_impl.1} parent=1 // pred_region
      %53 = dma.done [#allocation5], 2048
    $region37: #{_forward_impl.1} parent=1 // pred_fallthru
      _
    %v54 = vld [vmem:[%s0] sm:$0xff]
    %v55 = vld [vmem:[%s1] sm:$0xf]
    %v56 = vld [vmem:[%s2] sm:$0x1]
    %58 = vset.pattern.permute.xlu0 0
    %59 = vperm.xlu0 %58, %v54
    %v60 = vpop.permute.xlu0 %59
    %v62 = vlaneseq
    %v63 = vshrl.u32 %v62, 7
    %v64 = vsub.s32 0, %v63
    %v65 = vrot.slane %v55, %v64
    %v66 = vmul.f32 %v60, %v65
    %v68 = vlaneseq
    %v69 = vshrl.u32 %v68, 7
    %v70 = vsub.s32 0, %v69
    %v71 = vrot.slane %v56, %v70
    %v73 = vadd.f32 %v71, %v66
    %74 = vset.pattern.permute.xlu0 1
    %75 = vperm.xlu0 %74, %v54
    %v76 = vpop.permute.xlu0 %75
    %v78 = vlaneseq
    %v79 = vshrl.u32 %v78, 7
    %v80 = vsub.s32 1, %v79
    %v81 = vrot.slane %v55, %v80
    %v82 = vmul.f32 %v76, %v81
    %v83 = vadd.f32 %v73, %v82
    %84 = vset.pattern.permute.xlu0 2
    %85 = vperm.xlu0 %84, %v54
    %v86 = vpop.permute.xlu0 %85
    %v88 = vlaneseq
    %v89 = vshrl.u32 %v88, 7
    %v90 = vsub.s32 2, %v89
    %v91 = vrot.slane %v55, %v90
    %v92 = vmul.f32 %v86, %v91
    %v93 = vadd.f32 %v83, %v92
    %94 = vset.pattern.permute.xlu0 3
    %95 = vperm.xlu0 %94, %v54
    %v96 = vpop.permute.xlu0 %95
    %v98 = vlaneseq
    %v99 = vshrl.u32 %v98, 7
    %v100 = vsub.s32 3, %v99
    %v101 = vrot.slane %v55, %v100
    %v102 = vmul.f32 %v96, %v101
    %v103 = vadd.f32 %v93, %v102
    %v104 = vmax.f32 %v103, 0.0
    %v105 = vld [vmem:[#allocation2] sm:$0xff]
    %v106 = vld [vmem:[#allocation2 + $0x8] sm:$0xff]
    %v107 = vld [vmem:[#allocation2 + $0x10] sm:$0xff]
    %v108 = vld [vmem:[#allocation2 + $0x18] sm:$0xff]
    %v109 = vld [vmem:[#allocation2 + $0x20] sm:$0xff]
    %v110 = vld [vmem:[#allocation2 + $0x28] sm:$0xff]
    %v111 = vld [vmem:[#allocation2 + $0x30] sm:$0xff]
    %v112 = vld [vmem:[#allocation2 + $0x38] sm:$0xff]
    %v113 = vld [vmem:[#allocation2 + $0x40] sm:$0xff]
    %v114 = vld [vmem:[#allocation2 + $0x48] sm:$0xff]
    %v115 = vld [vmem:[#allocation2 + $0x50] sm:$0xff]
    %v116 = vld [vmem:[#allocation2 + $0x58] sm:$0xff]
    %v117 = vld [vmem:[#allocation2 + $0x60] sm:$0xff]
    %v118 = vld [vmem:[#allocation2 + $0x68] sm:$0xff]
    %v119 = vld [vmem:[#allocation2 + $0x70] sm:$0xff]
    %v120 = vld [vmem:[#allocation2 + $0x78] sm:$0xff]
    %v121 = vld [vmem:[%s4] sm:$0x1]
    %v123 = vlaneseq
    %v124 = vshrl.u32 %v123, 7
    %v125 = vsub.s32 0, %v124
    %v126 = vrot.slane %v121, %v125
    %128 = vmatprep.subr.mxu0 0.0
    %129 = vmatpush1.msra.mxu0 %v105
    %130 = vmatprep.subr.mxu0 0.0
    %131 = vmatpush1.msra.mxu0 %v106
    %132 = vmatprep.subr.mxu0 0.0
    %133 = vmatpush1.msra.mxu0 %v107
    %134 = vmatprep.subr.mxu0 0.0
    %135 = vmatpush1.msra.mxu0 %v108
    %136 = vmatprep.subr.mxu0 0.0
    %137 = vmatpush1.msra.mxu0 %v109
    %138 = vmatprep.subr.mxu0 0.0
    %139 = vmatpush1.msra.mxu0 %v110
    %140 = vmatprep.subr.mxu0 0.0
    %141 = vmatpush1.msra.mxu0 %v111
    %142 = vmatprep.subr.mxu0 0.0
    %143 = vmatpush1.msra.mxu0 %v112
    %144 = vmatprep.subr.mxu0 0.0
    %145 = vmatpush1.msra.mxu0 %v113
    %146 = vmatprep.subr.mxu0 0.0
    %147 = vmatpush1.msra.mxu0 %v114
    %148 = vmatprep.subr.mxu0 0.0
    %149 = vmatpush1.msra.mxu0 %v115
    %150 = vmatprep.subr.mxu0 0.0
    %151 = vmatpush1.msra.mxu0 %v116
    %152 = vmatprep.subr.mxu0 0.0
    %153 = vmatpush1.msra.mxu0 %v117
    %154 = vmatprep.subr.mxu0 0.0
    %155 = vmatpush1.msra.mxu0 %v118
    %156 = vmatprep.subr.mxu0 0.0
    %157 = vmatpush1.msra.mxu0 %v119
    %158 = vmatprep.subr.mxu0 0.0
    %159 = vmatpush1.msra.mxu0 %v120
    %160 = vmatprep.subr.mxu0 0.0
    %161 = vmatpush1.msra.mxu0 0.0
    %162 = vmatprep.subr.mxu0 0.0
    %163 = vmatpush1.msra.mxu0 0.0
    %164 = vmatprep.subr.mxu0 0.0
    %165 = vmatpush1.msra.mxu0 0.0
    %166 = vmatprep.subr.mxu0 0.0
    %167 = vmatpush1.msra.mxu0 0.0
    %168 = vmatprep.subr.mxu0 0.0
    %169 = vmatpush1.msra.mxu0 0.0
    %170 = vmatprep.subr.mxu0 0.0
    %171 = vmatpush1.msra.mxu0 0.0
    %172 = vmatprep.subr.mxu0 0.0
    %173 = vmatpush1.msra.mxu0 0.0
    %174 = vmatprep.subr.mxu0 0.0
    %175 = vmatpush1.msra.mxu0 0.0
    %176 = vmatprep.subr.mxu0 0.0
    %177 = vmatpush1.msra.mxu0 0.0
    %178 = vmatprep.subr.mxu0 0.0
    %179 = vmatpush1.msra.mxu0 0.0
    %180 = vmatprep.subr.mxu0 0.0
    %181 = vmatpush1.msra.mxu0 0.0
    %182 = vmatprep.subr.mxu0 0.0
    %183 = vmatpush1.msra.mxu0 0.0
    %184 = vmatprep.subr.mxu0 0.0
    %185 = vmatpush1.msra.mxu0 0.0
    %186 = vmatprep.subr.mxu0 0.0
    %187 = vmatpush1.msra.mxu0 0.0
    %188 = vmatprep.subr.mxu0 0.0
    %189 = vmatpush1.msra.mxu0 0.0
    %190 = vmatprep.subr.mxu0 0.0
    %191 = vmatpush1.msra.mxu0 0.0
    %192 = vmatprep.mubr.f32.mxu0 0.0
    %193 = vmatmul.mubr.f32.gmra.mrb[0].mxu0 %v104
    %v194 = vpop.f32.mrb[0].mxu0
    %v195 = vadd.f32 %v126, %v194
    %v196 = vpop.f32.mrb[0].mxu0
    %197 = vdwg.mxu0
    %v198 = vmax.f32 %v195, 0.0
    %v199 = vld [vmem:[#allocation4] sm:$0xff]
    %v200 = vld [vmem:[#allocation4 + $0x8] sm:$0xff]
    %v201 = vld [vmem:[#allocation4 + $0x10] sm:$0xff]
    %v202 = vld [vmem:[#allocation4 + $0x18] sm:$0xff]
    %v203 = vld [vmem:[#allocation4 + $0x20] sm:$0xff]
    %v204 = vld [vmem:[#allocation4 + $0x28] sm:$0xff]
    %v205 = vld [vmem:[#allocation4 + $0x30] sm:$0xff]
    %v206 = vld [vmem:[#allocation4 + $0x38] sm:$0xff]
    %v207 = vld [vmem:[#allocation4 + $0x40] sm:$0xff]
    %v208 = vld [vmem:[#allocation4 + $0x48] sm:$0xff]
    %v209 = vld [vmem:[#allocation4 + $0x50] sm:$0xff]
    %v210 = vld [vmem:[#allocation4 + $0x58] sm:$0xff]
    %v211 = vld [vmem:[#allocation4 + $0x60] sm:$0xff]
    %v212 = vld [vmem:[#allocation4 + $0x68] sm:$0xff]
    %v213 = vld [vmem:[#allocation4 + $0x70] sm:$0xff]
    %v214 = vld [vmem:[#allocation4 + $0x78] sm:$0xff]
    %v215 = vld [vmem:[%s6] sm:$0x1]
    %v217 = vlaneseq
    %v218 = vshrl.u32 %v217, 7
    %v219 = vsub.s32 0, %v218
    %v220 = vrot.slane %v215, %v219
    %222 = vmatprep.subr.mxu0 0.0
    %223 = vmatpush1.msra.mxu0 %v199
    %224 = vmatprep.subr.mxu0 0.0
    %225 = vmatpush1.msra.mxu0 %v200
    %226 = vmatprep.subr.mxu0 0.0
    %227 = vmatpush1.msra.mxu0 %v201
    %228 = vmatprep.subr.mxu0 0.0
    %229 = vmatpush1.msra.mxu0 %v202
    %230 = vmatprep.subr.mxu0 0.0
    %231 = vmatpush1.msra.mxu0 %v203
    %232 = vmatprep.subr.mxu0 0.0
    %233 = vmatpush1.msra.mxu0 %v204
    %234 = vmatprep.subr.mxu0 0.0
    %235 = vmatpush1.msra.mxu0 %v205
    %236 = vmatprep.subr.mxu0 0.0
    %237 = vmatpush1.msra.mxu0 %v206
    %238 = vmatprep.subr.mxu0 0.0
    %239 = vmatpush1.msra.mxu0 %v207
    %240 = vmatprep.subr.mxu0 0.0
    %241 = vmatpush1.msra.mxu0 %v208
    %242 = vmatprep.subr.mxu0 0.0
    %243 = vmatpush1.msra.mxu0 %v209
    %244 = vmatprep.subr.mxu0 0.0
    %245 = vmatpush1.msra.mxu0 %v210
    %246 = vmatprep.subr.mxu0 0.0
    %247 = vmatpush1.msra.mxu0 %v211
    %248 = vmatprep.subr.mxu0 0.0
    %249 = vmatpush1.msra.mxu0 %v212
    %250 = vmatprep.subr.mxu0 0.0
    %251 = vmatpush1.msra.mxu0 %v213
    %252 = vmatprep.subr.mxu0 0.0
    %253 = vmatpush1.msra.mxu0 %v214
    %254 = vmatprep.subr.mxu0 0.0
    %255 = vmatpush1.msra.mxu0 0.0
    %256 = vmatprep.subr.mxu0 0.0
    %257 = vmatpush1.msra.mxu0 0.0
    %258 = vmatprep.subr.mxu0 0.0
    %259 = vmatpush1.msra.mxu0 0.0
    %260 = vmatprep.subr.mxu0 0.0
    %261 = vmatpush1.msra.mxu0 0.0
    %262 = vmatprep.subr.mxu0 0.0
    %263 = vmatpush1.msra.mxu0 0.0
    %264 = vmatprep.subr.mxu0 0.0
    %265 = vmatpush1.msra.mxu0 0.0
    %266 = vmatprep.subr.mxu0 0.0
    %267 = vmatpush1.msra.mxu0 0.0
    %268 = vmatprep.subr.mxu0 0.0
    %269 = vmatpush1.msra.mxu0 0.0
    %270 = vmatprep.subr.mxu0 0.0
    %271 = vmatpush1.msra.mxu0 0.0
    %272 = vmatprep.subr.mxu0 0.0
    %273 = vmatpush1.msra.mxu0 0.0
    %274 = vmatprep.subr.mxu0 0.0
    %275 = vmatpush1.msra.mxu0 0.0
    %276 = vmatprep.subr.mxu0 0.0
    %277 = vmatpush1.msra.mxu0 0.0
    %278 = vmatprep.subr.mxu0 0.0
    %279 = vmatpush1.msra.mxu0 0.0
    %280 = vmatprep.subr.mxu0 0.0
    %281 = vmatpush1.msra.mxu0 0.0
    %282 = vmatprep.subr.mxu0 0.0
    %283 = vmatpush1.msra.mxu0 0.0
    %284 = vmatprep.subr.mxu0 0.0
    %285 = vmatpush1.msra.mxu0 0.0
    %286 = vmatprep.mubr.f32.mxu0 0.0
    %287 = vmatmul.mubr.f32.gmra.mrb[0].mxu0 %v198
    %v288 = vpop.f32.mrb[0].mxu0
    %v289 = vadd.f32 %v220, %v288
    %v290 = vpop.f32.mrb[0].mxu0
    %291 = vdwg.mxu0
    %292 = vst [vmem:[%s7] sm:$0xff] %v289
    // Predicated region
    $region38: #{_forward_impl.1} parent=1 // pred_check
      _
    $region39: #{_forward_impl.1} parent=1 // pred_check_branch
      %294 = sbr.rel (0) target = $region41
    $region40: #{_forward_impl.1} parent=1 // pred_region
      _
    $region41: #{_forward_impl.1} parent=1 // pred_fallthru
      _
    // Predicated region
    $region42: #{_forward_impl.1} parent=1 // pred_check
      _
    $region43: #{_forward_impl.1} parent=1 // pred_check_branch
      %296 = sbr.rel (0) target = $region45
    $region44: #{_forward_impl.1} parent=1 // pred_region
      _
    $region45: #{_forward_impl.1} parent=1 // pred_fallthru
      _
    %297 = vsyncpa [#allocation3], 1
    %298 = vsyncpa [#allocation5], 1

</llo_original>
